<compile_context>
chip_gen: v5e
topology: v5e:2x2
jax: 0.10.0
libtpu: 0.0.40
codegen_flags: <defaults>
</compile_context>

<pallas_src>
import functools
import math
from typing import NamedTuple

import jax
import jax.numpy as jnp
from jax import lax
from jax.experimental import pallas as pl
from jax.experimental.pallas import tpu as pltpu


# ---------------------------------------------------------------------------
# Helpers: rounding, device-dependent tile / VMEM budget selection.
# ---------------------------------------------------------------------------

def _round_up(n, m):
    return (n + m - 1) // m * m


def _cdiv(a, b):
    return (a + b - 1) // b


def _vmem_budget_and_cores():
    """(vmem_limit_bytes, tensorcores_per_chip) for the current TPU."""
    try:
        kind = jax.devices()[0].device_kind.lower()
    except Exception:  # pragma: no cover - defensive
        kind = ""
    if "v7" in kind:
        # v7x: 64 MiB VMEM per TensorCore, 2 TensorCores per chip.
        return 56 * 1024 * 1024, 2
    # v5e / v6e: 128 MiB VMEM, 1 TensorCore.
    return 100 * 1024 * 1024, 1


def _vmem_estimate(tm, ti, hp, cb):
    """Rough VMEM bytes: double-buffered x/out/weight tiles + f32 accumulator."""
    return (2 * tm * hp * cb            # x tile (double-buffered)
            + 2 * tm * hp * cb          # out tile
            + 2 * hp * (2 * ti) * cb    # fused gate|up weight tile
            + 2 * ti * hp * cb          # down_proj weight tile
            + tm * hp * 4)              # f32 accumulator scratch


def _pick_tiles(hp, compute_bytes):
    """Largest (tm, ti) that fits the per-generation VMEM budget.

    Prefer large tm (weight-reuse / arithmetic intensity), then large ti
    (lane-dense, DMA-friendly weight slices)."""
    budget, n_cores = _vmem_budget_and_cores()
    for tm in (1024, 768, 512, 384, 256, 128):
        for ti in (512, 256):
            if _vmem_estimate(tm, ti, hp, compute_bytes) <= budget:
                return tm, ti, budget, n_cores
    return 128, 128, budget, n_cores


# ---------------------------------------------------------------------------
# One-time weight preparation (pad + fuse + cast); hoisted out of forward.
# ---------------------------------------------------------------------------

class LlamaMLPWeights(NamedTuple):
    wgu: jax.Array        # [Hp, 2*Ip]  gate/up fused, interleaved per ti tile
    wd: jax.Array         # [Ip, Hp]    down_proj
    hidden: int           # original hidden size H
    intermediate: int     # original intermediate size I
    ti: int                # intermediate-dim tile used for the fused layout
    tm: int                # default token-dim tile for this generation


def prepare_llama_mlp_weights(wg, wu, wd, *, compute_dtype=jnp.bfloat16,
                              ti=None, tm=None):
    """Pad / fuse / cast the MLP weights once (do this at model init).

    wg, wu: [hidden, intermediate]  (transposed from torch's [out, in])
    wd:     [intermediate, hidden]
    """
    H, I = wg.shape
    assert wu.shape == (H, I) and wd.shape == (I, H)

    Hp = _round_up(H, 128)
    cb = jnp.dtype(compute_dtype).itemsize
    auto_tm, auto_ti, _, _ = _pick_tiles(Hp, cb)
    if tm is None:
        tm = auto_tm
    if ti is None:
        ti = auto_ti
    ti = min(ti, _round_up(I, 128))
    Ip = _round_up(I, ti)

    wgp = jnp.pad(wg, ((0, Hp - H), (0, Ip - I))).astype(compute_dtype)
    wup = jnp.pad(wu, ((0, Hp - H), (0, Ip - I))).astype(compute_dtype)
    wdp = jnp.pad(wd, ((0, Ip - I), (0, Hp - H))).astype(compute_dtype)

    # Interleave gate / up at ti granularity along the output axis so one
    # (Hp, 2*ti) block per reduction step contains [gate tile i || up tile i].
    n_tiles = Ip // ti
    wgu = jnp.concatenate(
        [wgp.reshape(Hp, n_tiles, ti), wup.reshape(Hp, n_tiles, ti)], axis=2
    ).reshape(Hp, 2 * Ip)

    return LlamaMLPWeights(wgu=wgu, wd=wdp, hidden=H, intermediate=I,
                           ti=ti, tm=tm)


# ---------------------------------------------------------------------------
# Kernel.
# ---------------------------------------------------------------------------

def _llama_mlp_kernel(x_ref, wgu_ref, wd_ref, o_ref, acc_ref, *, ti):
    # Grid: (m_tiles, i_tiles); axis 1 (intermediate dim) is the reduction.
    i_step = pl.program_id(1)

    @pl.when(i_step == 0)
    def _():
        acc_ref[...] = jnp.zeros_like(acc_ref)

    x = x_ref[...]                                               # [tm, Hp] bf16
    # Single fused matmul for gate and up: [tm, Hp] @ [Hp, 2*ti] -> f32.
    gu = jnp.dot(x, wgu_ref[...], preferred_element_type=jnp.float32)
    gate = gu[:, :ti]
    up = gu[:, ti:]

    # Exact GELU (torch.nn.GELU default): 0.5*g*(1 + erf(g/sqrt(2))) in f32.
    # TODO(synk): on v5e a tanh-approx GELU would offload to the EUP slot.
    g = 0.5 * gate * (1.0 + lax.erf(gate * (1.0 / math.sqrt(2.0))))
    h = (g * up).astype(wd_ref.dtype)                            # [tm, ti]

    acc_ref[...] += jnp.dot(h, wd_ref[...],
                            preferred_element_type=jnp.float32)

    @pl.when(i_step == pl.num_programs(1) - 1)
    def _():
        o_ref[...] = acc_ref[...].astype(o_ref.dtype)


# ---------------------------------------------------------------------------
# Forward wrapper.
# ---------------------------------------------------------------------------

@functools.partial(
    jax.jit,
    static_argnames=("M", "Mp", "Hp", "Ip", "ti", "tm", "vmem_limit"))
def _llama_mlp_call(x2, wgu, wd, *, M, Mp, Hp, Ip, ti, tm, vmem_limit):
    H = x2.shape[1]
    # Only the cheap x pad/cast lives inside the per-call path.
    xp = jnp.pad(x2, ((0, Mp - M), (0, Hp - H))).astype(wgu.dtype)

    grid = (Mp // tm, Ip // ti)

    out = pl.pallas_call(
        functools.partial(_llama_mlp_kernel, ti=ti),
        out_shape=jax.ShapeDtypeStruct((Mp, Hp), x2.dtype),
        grid_spec=pltpu.PrefetchScalarGridSpec(
            num_scalar_prefetch=0,
            grid=grid,
            in_specs=[
                # x tile: resident across the whole I reduction (constant i).
                pl.BlockSpec((tm, Hp), lambda m, i: (m, 0)),
                # fused gate|up weight tile, streamed along the reduction.
                pl.BlockSpec((Hp, 2 * ti), lambda m, i: (0, i)),
                # down_proj weight tile, streamed along the reduction.
                pl.BlockSpec((ti, Hp), lambda m, i: (i, 0)),
            ],
            out_specs=pl.BlockSpec((tm, Hp), lambda m, i: (m, 0)),
            scratch_shapes=[pltpu.VMEM((tm, Hp), jnp.float32)],
        ),
        compiler_params=pltpu.CompilerParams(
            dimension_semantics=("parallel", "arbitrary"),
            vmem_limit_bytes=vmem_limit,
        ),
    )(xp, wgu, wd)

    return out[:M, :H]


def llama_mlp(x, weights: LlamaMLPWeights, *, tm=None):
    """LlamaMLP forward: down_proj(GELU(x @ wg) * (x @ wu)).

    x: [..., hidden]; weights from prepare_llama_mlp_weights.
    """
    orig_shape = x.shape
    H = weights.hidden
    assert orig_shape[-1] == H, "trailing dim must equal hidden_size"
    M = 1
    for d in orig_shape[:-1]:
        M *= d

    Hp = weights.wgu.shape[0]
    Ip = weights.wd.shape[0]
    ti = weights.ti
    if tm is None:
        tm = weights.tm

    vmem_limit, n_cores = _vmem_budget_and_cores()

    # Clamp the token tile to the (sublane-aligned) token count; on v7x make
    # sure the parallel m axis has at least one tile per TensorCore.
    tm_eff = min(tm, _round_up(M, 8))
    if n_cores > 1 and M > 8:
        tm_eff = min(tm_eff, _round_up(_cdiv(M, n_cores), 8))
    Mp = _round_up(M, tm_eff)

    out2 = _llama_mlp_call(
        x.reshape(M, H), weights.wgu, weights.wd,
        M=M, Mp=Mp, Hp=Hp, Ip=Ip, ti=ti, tm=tm_eff, vmem_limit=vmem_limit)
    return out2.reshape(orig_shape)


# ---------------------------------------------------------------------------
# Reference + self-test.
# ---------------------------------------------------------------------------

def _reference(x, wg, wu, wd, compute_dtype=jnp.float32):
    cd = compute_dtype
    xd = x.astype(cd)
    gate = jnp.dot(xd, wg.astype(cd), preferred_element_type=jnp.float32)
    up = jnp.dot(xd, wu.astype(cd), preferred_element_type=jnp.float32)
    g = 0.5 * gate * (1.0 + lax.erf(gate / math.sqrt(2.0)))
    h = (g * up).astype(cd)
    out = jnp.dot(h, wd.astype(cd), preferred_element_type=jnp.float32)
    return out.astype(x.dtype)


if __name__ == "__main__":
    B, S = 2, 8
    hidden_size, intermediate_size = 32, 64

    key = jax.random.PRNGKey(0)
    kx, kg, ku, kd = jax.random.split(key, 4)
    x = jax.random.normal(kx, (B, S, hidden_size), jnp.float32)
    # Weights stored as [in, out] (transposed from PyTorch's [out, in]).
    wg = jax.random.normal(kg, (hidden_size, intermediate_size), jnp.float32) * 0.05
    wu = jax.random.normal(ku, (hidden_size, intermediate_size), jnp.float32) * 0.05
    wd = jax.random.normal(kd, (intermediate_size, hidden_size), jnp.float32) * 0.05

    weights = prepare_llama_mlp_weights(wg, wu, wd, compute_dtype=jnp.bfloat16)
    out = jax.block_until_ready(llama_mlp(x, weights))

    ref_bf16 = _reference(x, wg, wu, wd, compute_dtype=jnp.bfloat16)
    ref_f32 = _reference(x, wg, wu, wd, compute_dtype=jnp.float32)

    assert out.shape == (B, S, hidden_size)
    assert out.dtype == x.dtype
    assert jnp.allclose(out, ref_bf16, rtol=1e-2, atol=1e-3), \
        "mismatch vs bf16-matmul reference"
    assert jnp.allclose(out, ref_f32, rtol=5e-2, atol=5e-3), \
        "mismatch vs f32 reference"
    print("KERNEL_OK")
</pallas_src>

<mosaic_0001>
module attributes {stable_mosaic.version = 11 : i64} {
  func.func @_llama_mlp_kernel(%arg0: i32, %arg1: i32, %arg2: memref<16x128xbf16, #tpu.memory_space<vmem>>, %arg3: memref<128x256xbf16, #tpu.memory_space<vmem>>, %arg4: memref<128x128xbf16, #tpu.memory_space<vmem>>, %arg5: memref<16x128xf32, #tpu.memory_space<vmem>>, %arg6: memref<16x128xf32, #tpu.memory_space<vmem>>) attributes {dimension_semantics = [#tpu.dimension_semantics<parallel>, #tpu.dimension_semantics<arbitrary>], iteration_bounds = array<i64: 1, 1>, scalar_prefetch = 0 : i64, scratch_operands = 1 : i64, tpu.core_type = #tpu.core_type<tc>, window_params = [{transform_indices = @transform_0, window_bounds = array<i64: 16, 128>}, {transform_indices = @transform_1, window_bounds = array<i64: 128, 256>}, {transform_indices = @transform_2, window_bounds = array<i64: 128, 128>}, {transform_indices = @transform_3, window_bounds = array<i64: 16, 128>}]} {
    %c0_i32 = arith.constant 0 : i32
    %0 = arith.cmpi eq, %arg1, %c0_i32 : i32
    %1 = arith.extui %0 : i1 to i32
    %c0_i32_0 = arith.constant 0 : i32
    %2 = arith.cmpi ne, %1, %c0_i32_0 : i32
    scf.if %2 {
      %cst_16 = arith.constant 0.000000e+00 : f32
      %26 = vector.broadcast %cst_16 : f32 to vector<16x128xf32>
      %c0_17 = arith.constant 0 : index
      %c0_18 = arith.constant 0 : index
      %27 = vector.load %arg6[%c0_17, %c0_18] : memref<16x128xf32, #tpu.memory_space<vmem>>, vector<16x128xf32>
      tpu.vector_store %arg6[%c0_17, %c0_18], %26 {strides = array<i32>} : memref<16x128xf32, #tpu.memory_space<vmem>>, vector<16x128xf32>,
    } else {
    }
    %c0 = arith.constant 0 : index
    %c0_1 = arith.constant 0 : index
    %3 = vector.load %arg2[%c0, %c0_1] : memref<16x128xbf16, #tpu.memory_space<vmem>>, vector<16x128xbf16>
    %c0_2 = arith.constant 0 : index
    %c0_3 = arith.constant 0 : index
    %4 = vector.load %arg3[%c0_2, %c0_3] : memref<128x256xbf16, #tpu.memory_space<vmem>>, vector<128x256xbf16>
    %cst = arith.constant dense<0.000000e+00> : vector<16x256xf32>
    %5 = tpu.matmul %3, %4, %cst {dimension_numbers = #tpu.dot_dimension_numbers<[1], [0], [0], [1], [0, 0, 1, 1], [], []>} : vector<16x128xbf16>, vector<128x256xbf16>, vector<16x256xf32> -> vector<16x256xf32>
    %6 = vector.extract_strided_slice %5 {offsets = [0, 0], sizes = [16, 128], strides = [1, 1]} : vector<16x256xf32> to vector<16x128xf32>
    %7 = vector.extract_strided_slice %5 {offsets = [0, 128], sizes = [16, 128], strides = [1, 1]} : vector<16x256xf32> to vector<16x128xf32>
    %cst_4 = arith.constant 5.000000e-01 : f32
    %8 = vector.broadcast %cst_4 : f32 to vector<16x128xf32>
    %9 = arith.mulf %8, %6 : vector<16x128xf32>
    %cst_5 = arith.constant 0.707106769 : f32
    %10 = vector.broadcast %cst_5 : f32 to vector<16x128xf32>
    %11 = arith.mulf %6, %10 : vector<16x128xf32>
    %12 = math.erf %11 : vector<16x128xf32>
    %cst_6 = arith.constant 1.000000e+00 : f32
    %13 = vector.broadcast %cst_6 : f32 to vector<16x128xf32>
    %14 = arith.addf %13, %12 : vector<16x128xf32>
    %15 = arith.mulf %9, %14 : vector<16x128xf32>
    %16 = arith.mulf %15, %7 : vector<16x128xf32>
    %17 = arith.truncf %16 : vector<16x128xf32> to vector<16x128xbf16>
    %c0_7 = arith.constant 0 : index
    %c0_8 = arith.constant 0 : index
    %18 = vector.load %arg6[%c0_7, %c0_8] : memref<16x128xf32, #tpu.memory_space<vmem>>, vector<16x128xf32>
    %c0_9 = arith.constant 0 : index
    %c0_10 = arith.constant 0 : index
    %19 = vector.load %arg4[%c0_9, %c0_10] : memref<128x128xbf16, #tpu.memory_space<vmem>>, vector<128x128xbf16>
    %cst_11 = arith.constant dense<0.000000e+00> : vector<16x128xf32>
    %20 = tpu.matmul %17, %19, %cst_11 {dimension_numbers = #tpu.dot_dimension_numbers<[1], [0], [0], [1], [0, 0, 1, 1], [], []>} : vector<16x128xbf16>, vector<128x128xbf16>, vector<16x128xf32> -> vector<16x128xf32>
    %21 = arith.addf %18, %20 : vector<16x128xf32>
    %c0_12 = arith.constant 0 : index
    %c0_13 = arith.constant 0 : index
    %22 = vector.load %arg6[%c0_12, %c0_13] : memref<16x128xf32, #tpu.memory_space<vmem>>, vector<16x128xf32>
    tpu.vector_store %arg6[%c0_12, %c0_13], %21 {strides = array<i32>} : memref<16x128xf32, #tpu.memory_space<vmem>>, vector<16x128xf32>,
    %c0_i32_14 = arith.constant 0 : i32
    %23 = arith.cmpi eq, %arg1, %c0_i32_14 : i32
    %24 = arith.extui %23 : i1 to i32
    %c0_i32_15 = arith.constant 0 : i32
    %25 = arith.cmpi ne, %24, %c0_i32_15 : i32
    scf.if %25 {
      %c0_16 = arith.constant 0 : index
      %c0_17 = arith.constant 0 : index
      %26 = vector.load %arg6[%c0_16, %c0_17] : memref<16x128xf32, #tpu.memory_space<vmem>>, vector<16x128xf32>
      %c0_18 = arith.constant 0 : index
      %c0_19 = arith.constant 0 : index
      %27 = vector.load %arg5[%c0_18, %c0_19] : memref<16x128xf32, #tpu.memory_space<vmem>>, vector<16x128xf32>
      tpu.vector_store %arg5[%c0_18, %c0_19], %26 {strides = array<i32>} : memref<16x128xf32, #tpu.memory_space<vmem>>, vector<16x128xf32>,
    } else {
    }
    return
  }
  func.func @transform_0(%arg0: i32, %arg1: i32) -> (i32, i32) {
    %c0_i32 = arith.constant 0 : i32
    %c0_i32_0 = arith.constant 0 : i32
    return %arg0, %c0_i32 : i32, i32
  }
  func.func @transform_1(%arg0: i32, %arg1: i32) -> (i32, i32) {
    %c0_i32 = arith.constant 0 : i32
    %c0_i32_0 = arith.constant 0 : i32
    return %c0_i32, %arg1 : i32, i32
  }
  func.func @transform_2(%arg0: i32, %arg1: i32) -> (i32, i32) {
    %c0_i32 = arith.constant 0 : i32
    %c0_i32_0 = arith.constant 0 : i32
    return %arg1, %c0_i32 : i32, i32
  }
  func.func @transform_3(%arg0: i32, %arg1: i32) -> (i32, i32) {
    %c0_i32 = arith.constant 0 : i32
    %c0_i32_0 = arith.constant 0 : i32
    return %arg0, %c0_i32 : i32, i32
  }
}

</mosaic_0001>

<llo_original>
// kernel: _llama_mlp_call.1
$region0: #{_llama_mlp_call.1}
  #allocation0 [shape = 'u32[]', space=smem, size = 0x4, offset = 0x4, fixed_abs, tag = 'smem constant byte address 0x4 - core index']
  #allocation1 [shape = 'u32[72,128]{1,0:T(1,128)}', space=vmem, size = 0x9000, scoped, tag = 'internal scratch']
  #allocation2 [shape = 'f32[16,128]{1,0:T(8,128)}', space=vmem, size = 0x2000, scoped, tag = 'scratch operand']
  %s0 = inlined_call_operand.vmem [shape: bf16[16,128], index: 0, kind: input, shape index: {}]
  %s1 = inlined_call_operand.hbm [shape: bf16[128,256], index: 1, kind: input, shape index: {}]
  %s2 = inlined_call_operand.hbm [shape: bf16[128,128], index: 2, kind: input, shape index: {}]
  %s3 = inlined_call_operand.hbm [shape: f32[16,128], index: 3, kind: output, shape index: {}]
  %s4 = sld [smem:[#allocation0]]
  $region38: #{_llama_mlp_call.1} parent=0
    _
  %s6 = ssub.s32 1, %s4
  %s7 = scalar_select 0, %s6, %s4
  $region1: #{_llama_mlp_call.1} parent=0
    #allocation3 [shape = 'u8[65536]{0}', space=vmem, size = 0x10000, scoped, tag = 'input window, operand 1, single buffered']
    #allocation4 [shape = 's32[1]{0}', space=sflag, size = 0x4, scoped, tag = 'scoped memory for _llama_mlp_call.1']
    #allocation5 [shape = 's32[1]{0}', space=sflag, size = 0x4, scoped, tag = 'scoped memory for _llama_mlp_call.1']
    #allocation6 [shape = 'u8[32768]{0}', space=vmem, size = 0x8000, scoped, tag = 'input window, operand 2, single buffered']
    #allocation7 [shape = 's32[1]{0}', space=sflag, size = 0x4, scoped, tag = 'scoped memory for _llama_mlp_call.1']
    #allocation8 [shape = 'u8[8192]{0}', space=vmem, size = 0x2000, scoped, tag = 'output window, operand 0, single buffered']
    %8 = vsyncpa [#allocation4], 0
    %9 = vsyncpa [#allocation7], 0
    %10 = vsyncpa [#allocation5], 0
    // Predicated region
    $region2: #{_llama_mlp_call.1} parent=1 // pred_check
      _
    $region3: #{_llama_mlp_call.1} parent=1 // pred_check_branch
      %12 = sbr.rel (0) target = $region5
    $region4: #{_llama_mlp_call.1} parent=1 // pred_region
      _
    $region5: #{_llama_mlp_call.1} parent=1 // pred_fallthru
      _
    // Predicated region
    $region6: #{_llama_mlp_call.1} parent=1 // pred_check
      _
    $region7: #{_llama_mlp_call.1} parent=1 // pred_check_branch
      %14 = sbr.rel (0) target = $region9
    $region8: #{_llama_mlp_call.1} parent=1 // pred_region
      %16 = vsyncadd [#allocation4], 0
      %s17 = sshll.u32 %s1, 4
      %s18 = int_to_ptr.hbm [resolvable:$true] %s17
      %s19 = sshll.u32 [#allocation3], 4
      %s20 = int_to_ptr.vmem [resolvable:$true] %s19
      %25 = dma.hbm_to_vmem [thread:$0]  %s18, 2048, %s20, [#allocation4], 128, 128, 8
    $region9: #{_llama_mlp_call.1} parent=1 // pred_fallthru
      _
    // Predicated region
    $region10: #{_llama_mlp_call.1} parent=1 // pred_check
      _
    $region11: #{_llama_mlp_call.1} parent=1 // pred_check_branch
      %27 = sbr.rel (0) target = $region13
    $region12: #{_llama_mlp_call.1} parent=1 // pred_region
      %29 = vsyncadd [#allocation7], 0
      %s30 = sshll.u32 %s2, 4
      %s31 = int_to_ptr.hbm [resolvable:$true] %s30
      %s32 = sshll.u32 [#allocation6], 4
      %s33 = int_to_ptr.vmem [resolvable:$true] %s32
      %38 = dma.hbm_to_vmem [thread:$0]  %s31, 1024, %s33, [#allocation7], 64, 64, 4
    $region13: #{_llama_mlp_call.1} parent=1 // pred_fallthru
      _
    // Predicated region
    $region14: #{_llama_mlp_call.1} parent=1 // pred_check
      _
    $region15: #{_llama_mlp_call.1} parent=1 // pred_check_branch
      %40 = sbr.rel (0) target = $region17
    $region16: #{_llama_mlp_call.1} parent=1 // pred_region
      %42 = dma.done [#allocation4], 2048
    $region17: #{_llama_mlp_call.1} parent=1 // pred_fallthru
      _
    // Predicated region
    $region18: #{_llama_mlp_call.1} parent=1 // pred_check
      _
    $region19: #{_llama_mlp_call.1} parent=1 // pred_check_branch
      %44 = sbr.rel (0) target = $region21
    $region20: #{_llama_mlp_call.1} parent=1 // pred_region
      %46 = dma.done [#allocation7], 1024
    $region21: #{_llama_mlp_call.1} parent=1 // pred_fallthru
      _
    %p47 = scmp.eq.s32.totalorder 0, 0
    // Predicated region
    $region22: #{_llama_mlp_call.1} parent=1 // pred_check
      %p48 = pneg %p47
    $region23: #{_llama_mlp_call.1} parent=1 // pred_check_branch
      %50 = sbr.rel (%p48) target = $region25
    $region24: #{_llama_mlp_call.1} parent=1 // pred_region
      %51 = vst [vmem:[#allocation2] sm:$0xff] 0.0
      %52 = vst [vmem:[#allocation2 + $0x8] sm:$0xff] 0.0
    $region25: #{_llama_mlp_call.1} parent=1 // pred_fallthru
      _
    %v53 = vld [vmem:[%s0] sm:$0xf]
    %v54 = vld [vmem:[%s0 + $0x4] sm:$0xf]
    %v55 = vld [vmem:[#allocation3] sm:$0xff]
    %v56 = vld [vmem:[#allocation3 + $0x8] sm:$0xff]
    %v57 = vld [vmem:[#allocation3 + $0x10] sm:$0xff]
    %v58 = vld [vmem:[#allocation3 + $0x18] sm:$0xff]
    %v59 = vld [vmem:[#allocation3 + $0x20] sm:$0xff]
    %v60 = vld [vmem:[#allocation3 + $0x28] sm:$0xff]
    %v61 = vld [vmem:[#allocation3 + $0x30] sm:$0xff]
    %v62 = vld [vmem:[#allocation3 + $0x38] sm:$0xff]
    %v63 = vld [vmem:[#allocation3 + $0x40] sm:$0xff]
    %v64 = vld [vmem:[#allocation3 + $0x48] sm:$0xff]
    %v65 = vld [vmem:[#allocation3 + $0x50] sm:$0xff]
    %v66 = vld [vmem:[#allocation3 + $0x58] sm:$0xff]
    %v67 = vld [vmem:[#allocation3 + $0x60] sm:$0xff]
    %v68 = vld [vmem:[#allocation3 + $0x68] sm:$0xff]
    %v69 = vld [vmem:[#allocation3 + $0x70] sm:$0xff]
    %v70 = vld [vmem:[#allocation3 + $0x78] sm:$0xff]
    %v73 = vunpack.c.l.b16 %v53
    %v74 = vunpack.c.l.b16 %v54
    %v75 = vpack.c.b16 %v74, %v73
    %v93 = vunpack.c.l.b16 %v55
    %v94 = vunpack.c.h.b16 %v55
    %v95 = vunpack.c.l.b16 %v56
    %v96 = vunpack.c.h.b16 %v56
    %v97 = vunpack.c.l.b16 %v57
    %v98 = vunpack.c.h.b16 %v57
    %v99 = vunpack.c.l.b16 %v58
    %v100 = vunpack.c.h.b16 %v58
    %v101 = vunpack.c.l.b16 %v59
    %v102 = vunpack.c.h.b16 %v59
    %v103 = vunpack.c.l.b16 %v60
    %v104 = vunpack.c.h.b16 %v60
    %v105 = vunpack.c.l.b16 %v61
    %v106 = vunpack.c.h.b16 %v61
    %v107 = vunpack.c.l.b16 %v62
    %v108 = vunpack.c.h.b16 %v62
    %v109 = vunpack.c.l.b16 %v63
    %v110 = vunpack.c.h.b16 %v63
    %v111 = vunpack.c.l.b16 %v64
    %v112 = vunpack.c.h.b16 %v64
    %v113 = vunpack.c.l.b16 %v65
    %v114 = vunpack.c.h.b16 %v65
    %v115 = vunpack.c.l.b16 %v66
    %v116 = vunpack.c.h.b16 %v66
    %v117 = vunpack.c.l.b16 %v67
    %v118 = vunpack.c.h.b16 %v67
    %v119 = vunpack.c.l.b16 %v68
    %v120 = vunpack.c.h.b16 %v68
    %v121 = vunpack.c.l.b16 %v69
    %v122 = vunpack.c.h.b16 %v69
    %v123 = vunpack.c.l.b16 %v70
    %v124 = vunpack.c.h.b16 %v70
    %v125 = vpack.c.b16 %v95, %v93
    %v126 = vpack.c.b16 %v96, %v94
    %v127 = vpack.c.b16 %v99, %v97
    %v128 = vpack.c.b16 %v100, %v98
    %v129 = vpack.c.b16 %v103, %v101
    %v130 = vpack.c.b16 %v104, %v102
    %v131 = vpack.c.b16 %v107, %v105
    %v132 = vpack.c.b16 %v108, %v106
    %v133 = vpack.c.b16 %v111, %v109
    %v134 = vpack.c.b16 %v112, %v110
    %v135 = vpack.c.b16 %v115, %v113
    %v136 = vpack.c.b16 %v116, %v114
    %v137 = vpack.c.b16 %v119, %v117
    %v138 = vpack.c.b16 %v120, %v118
    %v139 = vpack.c.b16 %v123, %v121
    %v140 = vpack.c.b16 %v124, %v122
    %157 = vmatpush.bf16.msra.mxu0 %v139
    %158 = vmatpush.bf16.msra.mxu0 %v137
    %159 = vmatpush.bf16.msra.mxu0 %v135
    %160 = vmatpush.bf16.msra.mxu0 %v133
    %161 = vmatpush.bf16.msra.mxu0 %v131
    %162 = vmatpush.bf16.msra.mxu0 %v129
    %163 = vmatpush.bf16.msra.mxu0 %v127
    %164 = vmatpush.bf16.msra.mxu0 %v125
    %165 = vmatmul.bf16.gmra.mxu0 %v75
    %v166 = vpop.f32.mrf.mxu0
    %v167 = vadd.f32 0.0, %v166
    %v168 = vpop.f32.mrf.mxu0
    %v169 = vadd.f32 0.0, %v168
    %170 = vdwg.mxu0
    %171 = vmatpush.bf16.msra.mxu0 %v140
    %172 = vmatpush.bf16.msra.mxu0 %v138
    %173 = vmatpush.bf16.msra.mxu0 %v136
    %174 = vmatpush.bf16.msra.mxu0 %v134
    %175 = vmatpush.bf16.msra.mxu0 %v132
    %176 = vmatpush.bf16.msra.mxu0 %v130
    %177 = vmatpush.bf16.msra.mxu0 %v128
    %178 = vmatpush.bf16.msra.mxu0 %v126
    %179 = vmatmul.bf16.gmra.mxu0 %v75
    %v180 = vpop.f32.mrf.mxu0
    %v181 = vadd.f32 0.0, %v180
    %v182 = vpop.f32.mrf.mxu0
    %v183 = vadd.f32 0.0, %v182
    %184 = vdwg.mxu0
    %v185 = vmul.f32 %v167, 0.5
    %v186 = vmul.f32 %v169, 0.5
    %v187 = vmul.f32 %v167, 0.70710677
    %v188 = vmul.f32 %v169, 0.70710677
    %v189 = vmul.f32 %v187, %v187
    %v190 = vmin.f32 16.0, %v189
    %v191 = vmul.f32 %v190, 2.1237322e-06
    %v192 = vadd.f32 %v191, 0.00028619796
    %v193 = vmul.f32 %v190, %v192
    %v194 = vadd.f32 %v193, 0.0036580483
    %v195 = vmul.f32 %v190, %v194
    %v196 = vadd.f32 %v195, 0.05243302
    %v197 = vmul.f32 %v190, %v196
    %v198 = vadd.f32 %v197, 0.18741608
    %v199 = vmul.f32 %v190, %v198
    %v200 = vadd.f32 %v199, 1.1283791
    %v201 = vmul.f32 %v187, %v200
    %v202 = vmul.f32 %v190, 3.8918573e-05
    %v203 = vadd.f32 %v202, 0.001143296
    %v204 = vmul.f32 %v190, %v203
    %v205 = vadd.f32 %v204, 0.014752088
    %v206 = vmul.f32 %v190, %v205
    %v207 = vadd.f32 %v206, 0.112945676
    %v208 = vmul.f32 %v190, %v207
    %v209 = vadd.f32 %v208, 0.4994258
    %v210 = vmul.f32 %v190, %v209
    %v211 = vadd.f32 %v210, 1.0
    %v212 = vrcp.pop %v211
    %v213 = vmul.f32 %v211, %v212
    %v214 = vsub.f32 1.0, %v213
    %v215 = vmul.f32 %v212, %v214
    %v216 = vadd.f32 %v212, %v215
    %vm217 = vweird.f32 %v211
    %vm218 = vweird.f32 %v212
    %vm219 = vmor %vm217, %vm218
    %v220 = vsel %vm219, %v212, %v216
    %v221 = vand.u32 2147483647, %v211
    %vm222 = vcmp.eq.f32.partialorder %v221, 8.507059e+37
    %v223 = vand.u32 %v211, 2147483648
    %v224 = vor.u32 1.1754944e-38, %v223
    %v225 = vsel %vm222, %v224, %v220
    %v226 = vmul.f32 %v201, %v225
    %v227 = vmin.f32 %v226, 1.0
    %v228 = vmax.f32 %v227, -1.0
    %v229 = vmul.f32 %v188, %v188
    %v230 = vmin.f32 16.0, %v229
    %v231 = vmul.f32 %v230, 2.1237322e-06
    %v232 = vadd.f32 %v231, 0.00028619796
    %v233 = vmul.f32 %v230, %v232
    %v234 = vadd.f32 %v233, 0.0036580483
    %v235 = vmul.f32 %v230, %v234
    %v236 = vadd.f32 %v235, 0.05243302
    %v237 = vmul.f32 %v230, %v236
    %v238 = vadd.f32 %v237, 0.18741608
    %v239 = vmul.f32 %v230, %v238
    %v240 = vadd.f32 %v239, 1.1283791
    %v241 = vmul.f32 %v188, %v240
    %v242 = vmul.f32 %v230, 3.8918573e-05
    %v243 = vadd.f32 %v242, 0.001143296
    %v244 = vmul.f32 %v230, %v243
    %v245 = vadd.f32 %v244, 0.014752088
    %v246 = vmul.f32 %v230, %v245
    %v247 = vadd.f32 %v246, 0.112945676
    %v248 = vmul.f32 %v230, %v247
    %v249 = vadd.f32 %v248, 0.4994258
    %v250 = vmul.f32 %v230, %v249
    %v251 = vadd.f32 %v250, 1.0
    %v252 = vrcp.pop %v251
    %v253 = vmul.f32 %v251, %v252
    %v254 = vsub.f32 1.0, %v253
    %v255 = vmul.f32 %v252, %v254
    %v256 = vadd.f32 %v252, %v255
    %vm257 = vweird.f32 %v251
    %vm258 = vweird.f32 %v252
    %vm259 = vmor %vm257, %vm258
    %v260 = vsel %vm259, %v252, %v256
    %v261 = vand.u32 2147483647, %v251
    %vm262 = vcmp.eq.f32.partialorder %v261, 8.507059e+37
    %v263 = vand.u32 %v251, 2147483648
    %v264 = vor.u32 1.1754944e-38, %v263
    %v265 = vsel %vm262, %v264, %v260
    %v266 = vmul.f32 %v241, %v265
    %v267 = vmin.f32 %v266, 1.0
    %v268 = vmax.f32 %v267, -1.0
    %v269 = vadd.f32 %v228, 1.0
    %v270 = vadd.f32 %v268, 1.0
    %v271 = vmul.f32 %v185, %v269
    %v272 = vmul.f32 %v186, %v270
    %v273 = vmul.f32 %v271, %v181
    %v274 = vmul.f32 %v272, %v183
    %v275 = vpack.c.bf16 %v274, %v273
    %v276 = vld [vmem:[#allocation2] sm:$0xff]
    %v277 = vld [vmem:[#allocation2 + $0x8] sm:$0xff]
    %v278 = vld [vmem:[#allocation6] sm:$0xf]
    %v279 = vld [vmem:[#allocation6 + $0x4] sm:$0xf]
    %v280 = vld [vmem:[#allocation6 + $0x8] sm:$0xf]
    %v281 = vld [vmem:[#allocation6 + $0xc] sm:$0xf]
    %v282 = vld [vmem:[#allocation6 + $0x10] sm:$0xf]
    %v283 = vld [vmem:[#allocation6 + $0x14] sm:$0xf]
    %v284 = vld [vmem:[#allocation6 + $0x18] sm:$0xf]
    %v285 = vld [vmem:[#allocation6 + $0x1c] sm:$0xf]
    %v286 = vld [vmem:[#allocation6 + $0x20] sm:$0xf]
    %v287 = vld [vmem:[#allocation6 + $0x24] sm:$0xf]
    %v288 = vld [vmem:[#allocation6 + $0x28] sm:$0xf]
    %v289 = vld [vmem:[#allocation6 + $0x2c] sm:$0xf]
    %v290 = vld [vmem:[#allocation6 + $0x30] sm:$0xf]
    %v291 = vld [vmem:[#allocation6 + $0x34] sm:$0xf]
    %v292 = vld [vmem:[#allocation6 + $0x38] sm:$0xf]
    %v293 = vld [vmem:[#allocation6 + $0x3c] sm:$0xf]
    %v310 = vunpack.c.l.b16 %v278
    %v311 = vunpack.c.l.b16 %v279
    %v312 = vunpack.c.l.b16 %v280
    %v313 = vunpack.c.l.b16 %v281
    %v314 = vunpack.c.l.b16 %v282
    %v315 = vunpack.c.l.b16 %v283
    %v316 = vunpack.c.l.b16 %v284
    %v317 = vunpack.c.l.b16 %v285
    %v318 = vunpack.c.l.b16 %v286
    %v319 = vunpack.c.l.b16 %v287
    %v320 = vunpack.c.l.b16 %v288
    %v321 = vunpack.c.l.b16 %v289
    %v322 = vunpack.c.l.b16 %v290
    %v323 = vunpack.c.l.b16 %v291
    %v324 = vunpack.c.l.b16 %v292
    %v325 = vunpack.c.l.b16 %v293
    %v326 = vpack.c.b16 %v311, %v310
    %v327 = vpack.c.b16 %v313, %v312
    %v328 = vpack.c.b16 %v315, %v314
    %v329 = vpack.c.b16 %v317, %v316
    %v330 = vpack.c.b16 %v319, %v318
    %v331 = vpack.c.b16 %v321, %v320
    %v332 = vpack.c.b16 %v323, %v322
    %v333 = vpack.c.b16 %v325, %v324
    %342 = vmatpush.bf16.msra.mxu0 %v333
    %343 = vmatpush.bf16.msra.mxu0 %v332
    %344 = vmatpush.bf16.msra.mxu0 %v331
    %345 = vmatpush.bf16.msra.mxu0 %v330
    %346 = vmatpush.bf16.msra.mxu0 %v329
    %347 = vmatpush.bf16.msra.mxu0 %v328
    %348 = vmatpush.bf16.msra.mxu0 %v327
    %349 = vmatpush.bf16.msra.mxu0 %v326
    %350 = vmatmul.bf16.gmra.mxu0 %v275
    %v351 = vpop.f32.mrf.mxu0
    %v352 = vadd.f32 0.0, %v351
    %v353 = vpop.f32.mrf.mxu0
    %v354 = vadd.f32 0.0, %v353
    %355 = vdwg.mxu0
    %v356 = vadd.f32 %v276, %v352
    %v357 = vadd.f32 %v277, %v354
    %358 = vst [vmem:[#allocation2] sm:$0xff] %v356
    %359 = vst [vmem:[#allocation2 + $0x8] sm:$0xff] %v357
    // Predicated region
    $region26: #{_llama_mlp_call.1} parent=1 // pred_check
      %p360 = pneg %p47
    $region27: #{_llama_mlp_call.1} parent=1 // pred_check_branch
      %362 = sbr.rel (%p360) target = $region29
    $region28: #{_llama_mlp_call.1} parent=1 // pred_region
      %v363 = vld [vmem:[#allocation2] sm:$0xff]
      %v364 = vld [vmem:[#allocation2 + $0x8] sm:$0xff]
      %365 = vst [vmem:[#allocation8] sm:$0xff] %v363
      %366 = vst [vmem:[#allocation8 + $0x8] sm:$0xff] %v364
    $region29: #{_llama_mlp_call.1} parent=1 // pred_fallthru
      _
    // Predicated region
    $region30: #{_llama_mlp_call.1} parent=1 // pred_check
      _
    $region31: #{_llama_mlp_call.1} parent=1 // pred_check_branch
      %368 = sbr.rel (0) target = $region33
    $region32: #{_llama_mlp_call.1} parent=1 // pred_region
      %370 = vsyncadd [#allocation5], 0
      %s371 = sshll.u32 [#allocation8], 4
      %s372 = int_to_ptr.vmem [resolvable:$true] %s371
      %s373 = sshll.u32 %s3, 4
      %s374 = int_to_ptr.hbm [resolvable:$true] %s373
      %379 = dma.vmem_to_hbm [thread:$0]  %s372, 256, %s374, [#allocation5], 128, 128, 8
    $region33: #{_llama_mlp_call.1} parent=1 // pred_fallthru
      _
    // Predicated region
    $region34: #{_llama_mlp_call.1} parent=1 // pred_check
      _
    $region35: #{_llama_mlp_call.1} parent=1 // pred_check_branch
      %381 = sbr.rel (0) target = $region37
    $region36: #{_llama_mlp_call.1} parent=1 // pred_region
      %383 = dma.done [#allocation5], 256
    $region37: #{_llama_mlp_call.1} parent=1 // pred_fallthru
      _
    %384 = vsyncpa [#allocation4], 1
    %385 = vsyncpa [#allocation7], 1
    %386 = vsyncpa [#allocation5], 1

</llo_original>
